<compile_context>
chip_gen: v7x
topology: tpu7x:2x2x1
jax: 0.10.0
libtpu: 0.0.40
codegen_flags: <defaults>
</compile_context>

<pallas_src>
import functools

import jax
import jax.numpy as jnp
from jax.experimental import pallas as pl
from jax.experimental.pallas import tpu as pltpu

GAMMA = 2.0
ALPHA = 0.75

_LANE_CANDIDATES = (2048, 1024, 512, 256, 128)


def _detect_chip():
    """Best-effort TPU generation detection; never raises."""
    try:
        kind = jax.devices()[0].device_kind.lower()
    except Exception:  # pragma: no cover - defensive
        return "other"
    if "7" in kind:
        return "v7"
    if "v5 lite" in kind or "v5e" in kind or "v5litepod" in kind:
        return "v5e"
    return "other"


def _round_up(x, m):
    return ((x + m - 1) // m) * m


def _bce_focal_kernel(x_ref, t_ref, o_ref, *, gamma, alpha):
    # Promote to f32 only inside VMEM; HBM traffic stays in the storage dtype.
    x = x_ref[...].astype(jnp.float32)
    t = t_ref[...].astype(jnp.float32)

    pt = jax.nn.sigmoid(x)                      # torch.sigmoid(input)
    one_m_pt = 1.0 - pt

    # torch.clamp(torch.log(pt), min=-100, max=0)
    log_pt = jnp.clip(jnp.log(pt), -100.0, 0.0)
    # torch.clamp(torch.log(1 - pt), min=-100, max=0)
    log_1m_pt = jnp.clip(jnp.log(one_m_pt), -100.0, 0.0)

    if gamma == 2:
        # Explicit squares on the VPU (free filler slots) instead of a
        # float-exponent pow -> exp(gamma*log(.)) on the single-slot EUP.
        focal_pos = one_m_pt * one_m_pt
        focal_neg = pt * pt
    else:
        focal_pos = one_m_pt ** gamma
        focal_neg = pt ** gamma

    loss = (-alpha * focal_pos * t * log_pt
            - (1.0 - alpha) * focal_neg * (1.0 - t) * log_1m_pt)

    o_ref[...] = loss.astype(o_ref.dtype)


def _pick_layout(n):
    """Return (lanes, rows, needs_pad). Prefer exact divisors (no pad/slice)."""
    # 1) Largest lane width that divides n exactly AND keeps rows >= 8.
    for cand in _LANE_CANDIDATES:
        if n % cand == 0 and (n // cand) >= 8:
            return cand, n // cand, False
    # 2) Any exact divisor (tiny tensors: single full-dims block is fine).
    for cand in _LANE_CANDIDATES:
        if n % cand == 0:
            return cand, n // cand, False
    # 3) Fallback: pad to a multiple of the lane width.
    lanes = 128
    for cand in _LANE_CANDIDATES[:-1]:
        if n >= cand * 8:
            lanes = cand
            break
    rows = pl.cdiv(n, lanes)
    return lanes, rows, True


def bce_focal_loss(inp, target, gamma=GAMMA, alpha=ALPHA, reduction="None"):
    """Elementwise BCE focal loss. inp/target: any shape (e.g. NCHW logits)."""
    assert inp.shape == target.shape
    orig_shape = inp.shape
    out_dtype = inp.dtype

    n = inp.size
    chip = _detect_chip()

    lanes, rows, needs_pad = _pick_layout(n)
    n_pad = rows * lanes

    if needs_pad:
        # Only taken when n is not a multiple of 128 (rare for NCHW heads).
        x_flat = jnp.pad(inp.reshape(-1), (0, n_pad - n))
        t_flat = jnp.pad(target.reshape(-1), (0, n_pad - n))
        x2d = x_flat.reshape(rows, lanes)
        t2d = t_flat.reshape(rows, lanes)
    else:
        # Zero-copy (layout-preserving) reshape: no padded HBM copies.
        x2d = inp.reshape(rows, lanes)
        t2d = target.reshape(rows, lanes)

    # Per-generation block sizing (elements per block).
    #   v7x : ~1M elems (4 MiB f32/array/buffer) -> 24 MiB double-buffered.
    #   v5e / v6e / other: ~256K elems (1 MiB)   ->  6 MiB double-buffered.
    target_block_elems = (1024 * 1024) if chip == "v7" else (256 * 1024)
    target_rows = max(8, (target_block_elems // lanes) // 8 * 8)

    if rows <= target_rows:
        block_rows = rows          # single block == full array dims (allowed)
        if chip == "v7" and rows >= 9:
            # Give the 2 TensorCores at least 2 grid steps to shard.
            block_rows = max(8, _round_up(pl.cdiv(rows, 2), 8))
            if block_rows >= rows:
                block_rows = rows
    else:
        block_rows = target_rows   # multiple of 8 by construction

    grid = (pl.cdiv(rows, block_rows),)

    kernel = functools.partial(_bce_focal_kernel, gamma=gamma, alpha=alpha)

    itemsize = jnp.dtype(out_dtype).itemsize
    cost = pl.CostEstimate(
        flops=12 * n,
        transcendentals=4 * n,
        bytes_accessed=3 * n * itemsize,
    )

    out2d = pl.pallas_call(
        kernel,
        # Output written directly in the original dtype: no extra XLA convert
        # pass over HBM after the kernel.
        out_shape=jax.ShapeDtypeStruct((rows, lanes), out_dtype),
        grid_spec=pltpu.PrefetchScalarGridSpec(
            num_scalar_prefetch=0,
            grid=grid,
            in_specs=[
                pl.BlockSpec((block_rows, lanes), lambda i: (i, 0)),
                pl.BlockSpec((block_rows, lanes), lambda i: (i, 0)),
            ],
            out_specs=pl.BlockSpec((block_rows, lanes), lambda i: (i, 0)),
        ),
        compiler_params=pltpu.CompilerParams(
            dimension_semantics=("parallel",)),
        cost_estimate=cost,
    )(x2d, t2d)

    if needs_pad:
        loss = out2d.reshape(-1)[:n].reshape(orig_shape)
    else:
        loss = out2d.reshape(orig_shape)

    # Reductions (default is 'None') happen after any padded tail is dropped.
    if reduction == "mean":
        loss = jnp.mean(loss)
    elif reduction == "sum":
        loss = jnp.sum(loss)
    return loss


def _reference(inp, target, gamma=GAMMA, alpha=ALPHA):
    # Mirrors the PyTorch formula exactly.
    pt = jax.nn.sigmoid(inp)
    log_pt = jnp.clip(jnp.log(pt), -100.0, 0.0)
    log_1m_pt = jnp.clip(jnp.log(1.0 - pt), -100.0, 0.0)
    return (-alpha * (1 - pt) ** gamma * target * log_pt
            - (1 - alpha) * pt ** gamma * (1 - target) * log_1m_pt)


if __name__ == "__main__":
    key = jax.random.PRNGKey(0)
    k1, k2, k3, k4, k5, k6 = jax.random.split(key, 6)

    # Small NCHW detection-head-like inputs: logits + binary targets.
    N, C, H, W = 2, 4, 16, 16
    x = jax.random.normal(k1, (N, C, H, W), dtype=jnp.float32) * 3.0
    t = (jax.random.uniform(k2, (N, C, H, W)) > 0.5).astype(jnp.float32)

    loss = jax.block_until_ready(bce_focal_loss(x, t))
    ref = _reference(x, t)
    assert loss.shape == (N, C, H, W)
    assert loss.dtype == x.dtype
    assert jnp.allclose(loss, ref, atol=1e-5, rtol=1e-5)

    # Larger multiple-of-128 size: exercises the no-pad multi-block path.
    shape2 = (4, 8, 128, 100)
    x2 = jax.random.normal(k3, shape2, dtype=jnp.float32) * 3.0
    t2 = (jax.random.uniform(k4, shape2) > 0.5).astype(jnp.float32)
    loss2 = jax.block_until_ready(bce_focal_loss(x2, t2))
    ref2 = _reference(x2, t2)
    assert loss2.shape == shape2
    assert jnp.allclose(loss2, ref2, atol=1e-5, rtol=1e-5)

    # Awkward (non multiple-of-128) size: exercises the pad/slice fallback.
    shape3 = (3, 5, 17, 7)
    x3 = jax.random.normal(k5, shape3, dtype=jnp.float32) * 3.0
    t3 = (jax.random.uniform(k6, shape3) > 0.5).astype(jnp.float32)
    loss3 = jax.block_until_ready(bce_focal_loss(x3, t3))
    ref3 = _reference(x3, t3)
    assert loss3.shape == shape3
    assert jnp.allclose(loss3, ref3, atol=1e-5, rtol=1e-5)

    print("KERNEL_OK")
</pallas_src>

<mosaic_0001>
module attributes {stable_mosaic.version = 11 : i64} {
  func.func @_bce_focal_kernel(%arg0: i32, %arg1: memref<8x256xf32, #tpu.memory_space<vmem>>, %arg2: memref<8x256xf32, #tpu.memory_space<vmem>>, %arg3: memref<8x256xf32, #tpu.memory_space<vmem>>) attributes {dimension_semantics = [#tpu.dimension_semantics<parallel>], iteration_bounds = array<i64: 1>, scalar_prefetch = 0 : i64, scratch_operands = 0 : i64, tpu.core_type = #tpu.core_type<tc>, window_params = [{transform_indices = @transform_0, window_bounds = array<i64: 8, 256>}, {transform_indices = @transform_1, window_bounds = array<i64: 8, 256>}, {transform_indices = @transform_2, window_bounds = array<i64: 8, 256>}]} {
    %c0 = arith.constant 0 : index
    %c0_0 = arith.constant 0 : index
    %0 = vector.load %arg1[%c0, %c0_0] : memref<8x256xf32, #tpu.memory_space<vmem>>, vector<8x256xf32>
    %c0_1 = arith.constant 0 : index
    %c0_2 = arith.constant 0 : index
    %1 = vector.load %arg2[%c0_1, %c0_2] : memref<8x256xf32, #tpu.memory_space<vmem>>, vector<8x256xf32>
    %2 = arith.negf %0 : vector<8x256xf32>
    %3 = math.exp %2 : vector<8x256xf32>
    %cst = arith.constant 1.000000e+00 : f32
    %4 = vector.broadcast %cst : f32 to vector<8x256xf32>
    %5 = arith.addf %4, %3 : vector<8x256xf32>
    %6 = arith.divf %4, %5 : vector<8x256xf32>
    %cst_3 = arith.constant 1.000000e+00 : f32
    %7 = vector.broadcast %cst_3 : f32 to vector<8x256xf32>
    %8 = arith.subf %7, %6 : vector<8x256xf32>
    %9 = math.log %6 : vector<8x256xf32>
    %cst_4 = arith.constant -1.000000e+02 : f32
    %cst_5 = arith.constant 0.000000e+00 : f32
    %10 = vector.broadcast %cst_4 : f32 to vector<8x256xf32>
    %11 = arith.maximumf %10, %9 : vector<8x256xf32>
    %12 = vector.broadcast %cst_5 : f32 to vector<8x256xf32>
    %13 = arith.minimumf %12, %11 : vector<8x256xf32>
    %14 = math.log %8 : vector<8x256xf32>
    %cst_6 = arith.constant -1.000000e+02 : f32
    %cst_7 = arith.constant 0.000000e+00 : f32
    %15 = vector.broadcast %cst_6 : f32 to vector<8x256xf32>
    %16 = arith.maximumf %15, %14 : vector<8x256xf32>
    %17 = vector.broadcast %cst_7 : f32 to vector<8x256xf32>
    %18 = arith.minimumf %17, %16 : vector<8x256xf32>
    %19 = arith.mulf %8, %8 : vector<8x256xf32>
    %20 = arith.mulf %6, %6 : vector<8x256xf32>
    %cst_8 = arith.constant -7.500000e-01 : f32
    %21 = vector.broadcast %cst_8 : f32 to vector<8x256xf32>
    %22 = arith.mulf %21, %19 : vector<8x256xf32>
    %23 = arith.mulf %22, %1 : vector<8x256xf32>
    %24 = arith.mulf %23, %13 : vector<8x256xf32>
    %cst_9 = arith.constant 2.500000e-01 : f32
    %25 = vector.broadcast %cst_9 : f32 to vector<8x256xf32>
    %26 = arith.mulf %25, %20 : vector<8x256xf32>
    %cst_10 = arith.constant 1.000000e+00 : f32
    %27 = vector.broadcast %cst_10 : f32 to vector<8x256xf32>
    %28 = arith.subf %27, %1 : vector<8x256xf32>
    %29 = arith.mulf %26, %28 : vector<8x256xf32>
    %30 = arith.mulf %29, %18 : vector<8x256xf32>
    %31 = arith.subf %24, %30 : vector<8x256xf32>
    %c0_11 = arith.constant 0 : index
    %c0_12 = arith.constant 0 : index
    %32 = vector.load %arg3[%c0_11, %c0_12] : memref<8x256xf32, #tpu.memory_space<vmem>>, vector<8x256xf32>
    tpu.vector_store %arg3[%c0_11, %c0_12], %31 {strides = array<i32>} : memref<8x256xf32, #tpu.memory_space<vmem>>, vector<8x256xf32>,
    return
  }
  func.func @transform_0(%arg0: i32) -> (i32, i32) {
    %c0_i32 = arith.constant 0 : i32
    %c0_i32_0 = arith.constant 0 : i32
    return %arg0, %c0_i32 : i32, i32
  }
  func.func @transform_1(%arg0: i32) -> (i32, i32) {
    %c0_i32 = arith.constant 0 : i32
    %c0_i32_0 = arith.constant 0 : i32
    return %arg0, %c0_i32 : i32, i32
  }
  func.func @transform_2(%arg0: i32) -> (i32, i32) {
    %c0_i32 = arith.constant 0 : i32
    %c0_i32_0 = arith.constant 0 : i32
    return %arg0, %c0_i32 : i32, i32
  }
}

</mosaic_0001>

<llo_original>
// kernel: tpu_custom_call.1
$region0: #{tpu_custom_call.1}
  #allocation0 [shape = 'u32[]', space=smem, size = 0x4, offset = 0x4, fixed_abs, tag = 'smem constant byte address 0x4 - core index']
  #allocation1 [shape = 'u32[144,128]{1,0:T(1,128)}', space=vmem, size = 0x12000, scoped, tag = 'internal scratch']
  %s0 = inlined_call_operand.hbm [shape: f32[8,256], index: 0, kind: input, shape index: {}]
  %s1 = inlined_call_operand.hbm [shape: f32[8,256], index: 1, kind: input, shape index: {}]
  %s2 = inlined_call_operand.hbm [shape: f32[8,256], index: 2, kind: output, shape index: {}]
  %s3 = sld [smem:[#allocation0]]
  $region26: #{tpu_custom_call.1} parent=0
    _
  %s5 = ssub.s32 1, %s3
  %s6 = scalar_select 0, %s5, %s3
  $region1: #{tpu_custom_call.1} parent=0
    #allocation2 [shape = 'u8[8192]{0}', space=vmem, size = 0x2000, scoped, tag = 'input window, operand 0, single buffered']
    #allocation3 [shape = 's32[1]{0}', space=sflag, size = 0x4, scoped, tag = 'scoped memory for tpu_custom_call.1']
    #allocation4 [shape = 's32[1]{0}', space=sflag, size = 0x4, scoped, tag = 'scoped memory for tpu_custom_call.1']
    #allocation5 [shape = 'u8[8192]{0}', space=vmem, size = 0x2000, scoped, tag = 'input window, operand 1, single buffered']
    #allocation6 [shape = 's32[1]{0}', space=sflag, size = 0x4, scoped, tag = 'scoped memory for tpu_custom_call.1']
    #allocation7 [shape = 'u8[8192]{0}', space=vmem, size = 0x2000, scoped, tag = 'output window, operand 0, single buffered']
    %7 = vsyncpa [#allocation3], 0
    %8 = vsyncpa [#allocation6], 0
    %9 = vsyncpa [#allocation4], 0
    // Predicated region
    $region2: #{tpu_custom_call.1} parent=1 // pred_check
      _
    $region3: #{tpu_custom_call.1} parent=1 // pred_check_branch
      %11 = sbr.rel (0) target = $region5
    $region4: #{tpu_custom_call.1} parent=1 // pred_region
      %s13 = ssub.s32 256, 256
      %14 = vsyncadd [#allocation3], %s13
      %s16 = sshll.u32 [#allocation2], 4
      %s17 = int_to_ptr.vmem [resolvable:$true] %s16
      %19 = dma.hbm_to_vmem [thread:$0]  %s0, 256, %s17, [#allocation3]
    $region5: #{tpu_custom_call.1} parent=1 // pred_fallthru
      _
    // Predicated region
    $region6: #{tpu_custom_call.1} parent=1 // pred_check
      _
    $region7: #{tpu_custom_call.1} parent=1 // pred_check_branch
      %21 = sbr.rel (0) target = $region9
    $region8: #{tpu_custom_call.1} parent=1 // pred_region
      %s23 = ssub.s32 256, 256
      %24 = vsyncadd [#allocation6], %s23
      %s26 = sshll.u32 [#allocation5], 4
      %s27 = int_to_ptr.vmem [resolvable:$true] %s26
      %29 = dma.hbm_to_vmem [thread:$0]  %s1, 256, %s27, [#allocation6]
    $region9: #{tpu_custom_call.1} parent=1 // pred_fallthru
      _
    // Predicated region
    $region10: #{tpu_custom_call.1} parent=1 // pred_check
      _
    $region11: #{tpu_custom_call.1} parent=1 // pred_check_branch
      %31 = sbr.rel (0) target = $region13
    $region12: #{tpu_custom_call.1} parent=1 // pred_region
      %32 = dma.done [#allocation3], 256
    $region13: #{tpu_custom_call.1} parent=1 // pred_fallthru
      _
    // Predicated region
    $region14: #{tpu_custom_call.1} parent=1 // pred_check
      _
    $region15: #{tpu_custom_call.1} parent=1 // pred_check_branch
      %34 = sbr.rel (0) target = $region17
    $region16: #{tpu_custom_call.1} parent=1 // pred_region
      %35 = dma.done [#allocation6], 256
    $region17: #{tpu_custom_call.1} parent=1 // pred_fallthru
      _
    %v36 = vld [vmem:[#allocation2] sm:$0xff]
    %v37 = vld [vmem:[#allocation2 + $0x8] sm:$0xff]
    %v38 = vld [vmem:[#allocation5] sm:$0xff]
    %v39 = vld [vmem:[#allocation5 + $0x8] sm:$0xff]
    %v40 = vxor.u32 %v36, 2147483648
    %v41 = vxor.u32 %v37, 2147483648
    %v42 = vmul.f32 %v40, 1.442695
    %v43 = vpow.pop %v42
    %v44 = vmul.f32 %v41, 1.442695
    %v45 = vpow.pop %v44
    %v46 = vadd.f32 %v43, 1.0
    %v47 = vadd.f32 %v45, 1.0
    %v48 = vrcp.pop %v46
    %v49 = vmul.f32 1.0, %v48
    %v50 = vrcp.pop %v47
    %v51 = vmul.f32 1.0, %v50
    %v52 = vsub.f32 1.0, %v49
    %v53 = vsub.f32 1.0, %v51
    %v54 = vlog2.pop %v49
    %v55 = vmul.f32 %v54, 0.6931472
    %v56 = vlog2.pop %v51
    %v57 = vmul.f32 %v56, 0.6931472
    %v58 = vmax.f32 %v55, -100.0
    %v59 = vmax.f32 %v57, -100.0
    %v60 = vmin.f32 %v58, 0.0
    %v61 = vmin.f32 %v59, 0.0
    %v62 = vlog2.pop %v52
    %v63 = vmul.f32 %v62, 0.6931472
    %v64 = vlog2.pop %v53
    %v65 = vmul.f32 %v64, 0.6931472
    %v66 = vmax.f32 %v63, -100.0
    %v67 = vmax.f32 %v65, -100.0
    %v68 = vmin.f32 %v66, 0.0
    %v69 = vmin.f32 %v67, 0.0
    %v70 = vmul.f32 %v52, %v52
    %v71 = vmul.f32 %v53, %v53
    %v72 = vmul.f32 %v49, %v49
    %v73 = vmul.f32 %v51, %v51
    %v74 = vmul.f32 %v70, -0.75
    %v75 = vmul.f32 %v71, -0.75
    %v76 = vmul.f32 %v74, %v38
    %v77 = vmul.f32 %v75, %v39
    %v78 = vmul.f32 %v76, %v60
    %v79 = vmul.f32 %v77, %v61
    %v80 = vmul.f32 %v72, 0.25
    %v81 = vmul.f32 %v73, 0.25
    %v82 = vsub.f32 1.0, %v38
    %v83 = vsub.f32 1.0, %v39
    %v84 = vmul.f32 %v80, %v82
    %v85 = vmul.f32 %v81, %v83
    %v86 = vmul.f32 %v84, %v68
    %v87 = vmul.f32 %v85, %v69
    %v88 = vsub.f32 %v78, %v86
    %v89 = vsub.f32 %v79, %v87
    %90 = vst [vmem:[#allocation7] sm:$0xff] %v88
    %91 = vst [vmem:[#allocation7 + $0x8] sm:$0xff] %v89
    // Predicated region
    $region18: #{tpu_custom_call.1} parent=1 // pred_check
      _
    $region19: #{tpu_custom_call.1} parent=1 // pred_check_branch
      %93 = sbr.rel (0) target = $region21
    $region20: #{tpu_custom_call.1} parent=1 // pred_region
      %s95 = ssub.s32 256, 256
      %96 = vsyncadd [#allocation4], %s95
      %s98 = sshll.u32 [#allocation7], 4
      %s99 = int_to_ptr.vmem [resolvable:$true] %s98
      %101 = dma.vmem_to_hbm [thread:$0]  %s99, 256, %s2, [#allocation4]
    $region21: #{tpu_custom_call.1} parent=1 // pred_fallthru
      _
    // Predicated region
    $region22: #{tpu_custom_call.1} parent=1 // pred_check
      _
    $region23: #{tpu_custom_call.1} parent=1 // pred_check_branch
      %103 = sbr.rel (0) target = $region25
    $region24: #{tpu_custom_call.1} parent=1 // pred_region
      %104 = dma.done [#allocation4], 256
    $region25: #{tpu_custom_call.1} parent=1 // pred_fallthru
      _
    %105 = vsyncpa [#allocation3], 1
    %106 = vsyncpa [#allocation6], 1
    %107 = vsyncpa [#allocation4], 1

</llo_original>
